<compile_context>
chip_gen: v5e
topology: v5e:2x2
jax: 0.10.0
libtpu: 0.0.40
codegen_flags: <defaults>
</compile_context>

<pallas_src>
import jax
import jax.numpy as jnp
from jax.experimental import pallas as pl
from jax.experimental.pallas import tpu as pltpu

_EPS = 1e-12  # matches torch.nn.functional.normalize default eps


def _round_up(a, b):
    return (a + b - 1) // b * b


def _contrastive_head_kernel(x_ref, w_ref, sb_ref, o_ref):
    """One (batch, HW-tile) grid step.

    x_ref : (C, THW)  image features (channels on sublanes, pixels on lanes)
    w_ref : (K, C)    text embeddings for this batch element
    sb_ref: (2,)      SMEM scalars: [exp(logit_scale), bias]
    o_ref : (K, THW)  region-text logits
    """
    x = x_ref[...].astype(jnp.float32)
    w = w_ref[...].astype(jnp.float32)

    # L2-normalize x over channels (sublane reduce -> XLU; C is the short axis).
    x_norm = jnp.sqrt(jnp.sum(x * x, axis=0, keepdims=True))          # (1, THW)
    x_n = x / jnp.maximum(x_norm, _EPS)

    # L2-normalize w over channels (tiny (K, C) tile, negligible cost).
    w_norm = jnp.sqrt(jnp.sum(w * w, axis=-1, keepdims=True))         # (K, 1)
    w_n = w / jnp.maximum(w_norm, _EPS)

    # Region-text similarity on the MXU: (K, C) @ (C, THW) -> (K, THW).
    # (For very small C this is DMA-bound anyway; MXU utilization is irrelevant.)
    scores = jnp.dot(w_n, x_n, preferred_element_type=jnp.float32)

    scale = sb_ref[0]
    bias = sb_ref[1]
    o_ref[...] = (scores * scale + bias).astype(o_ref.dtype)


def contrastive_head_forward(x, w, logit_scale, bias, *, max_tile=512):
    """Pallas forward pass equivalent to ContrastiveHead.forward.

    x           : (B, C, H, W) image features
    w           : (B, K, C)    text features
    logit_scale : scalar (learnable parameter, log-scale)
    bias        : scalar (learnable parameter)
    returns     : (B, K, H, W)
    """
    B, C, H, W = x.shape
    Bw, K, Cw = w.shape
    assert Bw == B and Cw == C, "w must be (B, K, C) with matching B and C"
    HW = H * W

    # Lane-dense HW tile: multiple of 128, as large as max_tile.
    thw = min(_round_up(max_tile, 128), _round_up(HW, 128))
    HWp = _round_up(HW, thw)

    # NCHW stays NCHW: merging H and W is a free contiguous reshape; pixels land
    # on the lane axis so both the streaming load and the store are lane-dense.
    x3 = x.reshape(B, C, HW)
    if HWp != HW:
        # Masked tail handled by zero-padding the pixel axis (zero vectors
        # normalize to zero -> padded columns are just bias, sliced off below).
        x3 = jnp.pad(x3, ((0, 0), (0, 0), (0, HWp - HW)))

    scale_bias = jnp.stack(
        [jnp.exp(jnp.asarray(logit_scale, jnp.float32)),
         jnp.asarray(bias, jnp.float32)]
    )

    # VMEM budget: double-buffered x/out tiles + resident (K, C) block.
    vmem_needed = 4 * (2 * C * thw + 2 * K * thw + 2 * K * C) + (1 << 20)
    vmem_limit = vmem_needed if vmem_needed > (16 << 20) else None

    out = pl.pallas_call(
        _contrastive_head_kernel,
        out_shape=jax.ShapeDtypeStruct((B, K, HWp), x.dtype),
        grid=(B, HWp // thw),
        in_specs=[
            pl.BlockSpec((None, C, thw), lambda b, j: (b, 0, j)),
            pl.BlockSpec((None, K, C), lambda b, j: (b, 0, 0)),
            pl.BlockSpec(memory_space=pltpu.MemorySpace.SMEM),
        ],
        out_specs=pl.BlockSpec((None, K, thw), lambda b, j: (b, 0, j)),
        compiler_params=pltpu.CompilerParams(
            dimension_semantics=("parallel", "parallel"),
            vmem_limit_bytes=vmem_limit,
        ),
    )(x3, w, scale_bias)

    if HWp != HW:
        out = out[:, :, :HW]
    return out.reshape(B, K, H, W)


if __name__ == "__main__":
    # Small shapes consistent with the module: B=2, C=32 channels, 16x16
    # feature map, K=8 text embeddings.
    B, C, H, W, K = 2, 32, 16, 16, 8

    key = jax.random.PRNGKey(0)
    kx, kw = jax.random.split(key, 2)
    x = jax.random.normal(kx, (B, C, H, W), dtype=jnp.float32)
    w = jax.random.normal(kw, (B, K, C), dtype=jnp.float32)

    # Module parameters exactly as in ContrastiveHead.__init__
    bias = jnp.float32(-10.0)
    logit_scale = jnp.log(jnp.float32(1.0 / 0.07))

    out = contrastive_head_forward(x, w, logit_scale, bias)
    out = jax.block_until_ready(out)

    # Pure-JAX reference (mirrors F.normalize + einsum + scale/bias).
    xn = x / jnp.maximum(jnp.sqrt(jnp.sum(x * x, axis=1, keepdims=True)), 1e-12)
    wn = w / jnp.maximum(jnp.sqrt(jnp.sum(w * w, axis=-1, keepdims=True)), 1e-12)
    ref = jnp.einsum("bchw,bkc->bkhw", xn, wn,
                     precision=jax.lax.Precision.HIGHEST)
    ref = ref * jnp.exp(logit_scale) + bias

    assert out.shape == (B, K, H, W)
    if bool(jnp.allclose(out, ref, atol=1e-4, rtol=1e-4)):
        print("KERNEL_OK")
    else:
        raise SystemExit("mismatch vs reference")
</pallas_src>

<mosaic_0001>
module attributes {stable_mosaic.version = 11 : i64} {
  func.func @_contrastive_head_kernel(%arg0: i32, %arg1: i32, %arg2: memref<1x32x256xf32, #tpu.memory_space<vmem>>, %arg3: memref<1x8x32xf32, #tpu.memory_space<vmem>>, %arg4: memref<2xf32, #tpu.memory_space<smem>>, %arg5: memref<1x8x256xf32, #tpu.memory_space<vmem>>) attributes {dimension_semantics = [#tpu.dimension_semantics<parallel>, #tpu.dimension_semantics<parallel>], iteration_bounds = array<i64: 2, 1>, scalar_prefetch = 0 : i64, scratch_operands = 0 : i64, tpu.core_type = #tpu.core_type<tc>, window_params = [{transform_indices = @transform_0, window_bounds = array<i64: 1, 32, 256>}, {transform_indices = @transform_1, window_bounds = array<i64: 1, 8, 32>}, {transform_indices = @transform_2, window_bounds = array<i64: 2>}, {transform_indices = @transform_3, window_bounds = array<i64: 1, 8, 256>}]} {
    %c0 = arith.constant 0 : index
    %c0_0 = arith.constant 0 : index
    %c0_1 = arith.constant 0 : index
    %0 = vector.load %arg2[%c0, %c0_0, %c0_1] : memref<1x32x256xf32, #tpu.memory_space<vmem>>, vector<1x32x256xf32>
    %1 = vector.shape_cast %0 : vector<1x32x256xf32> to vector<32x256xf32>
    %c0_2 = arith.constant 0 : index
    %c0_3 = arith.constant 0 : index
    %c0_4 = arith.constant 0 : index
    %2 = vector.load %arg3[%c0_2, %c0_3, %c0_4] : memref<1x8x32xf32, #tpu.memory_space<vmem>>, vector<1x8x32xf32>
    %3 = vector.shape_cast %2 : vector<1x8x32xf32> to vector<8x32xf32>
    %4 = arith.mulf %1, %1 : vector<32x256xf32>
    %cst = arith.constant dense<0.000000e+00> : vector<256xf32>
    %5 = vector.multi_reduction <add>, %4, %cst [0] : vector<32x256xf32> to vector<256xf32>
    %6 = vector.shape_cast %5 : vector<256xf32> to vector<1x256xf32>
    %7 = math.sqrt %6 : vector<1x256xf32>
    %cst_5 = arith.constant 9.99999996E-13 : f32
    %8 = vector.broadcast %cst_5 : f32 to vector<1x256xf32>
    %9 = arith.maximumf %7, %8 : vector<1x256xf32>
    %10 = vector.broadcast %9 : vector<1x256xf32> to vector<32x256xf32>
    %11 = arith.divf %1, %10 : vector<32x256xf32>
    %12 = arith.mulf %3, %3 : vector<8x32xf32>
    %cst_6 = arith.constant dense<0.000000e+00> : vector<8xf32>
    %13 = vector.multi_reduction <add>, %12, %cst_6 [1] : vector<8x32xf32> to vector<8xf32>
    %14 = vector.shape_cast %13 : vector<8xf32> to vector<8x1xf32>
    %15 = math.sqrt %14 : vector<8x1xf32>
    %cst_7 = arith.constant 9.99999996E-13 : f32
    %16 = vector.broadcast %cst_7 : f32 to vector<8x1xf32>
    %17 = arith.maximumf %15, %16 : vector<8x1xf32>
    %18 = vector.broadcast %17 : vector<8x1xf32> to vector<8x32xf32>
    %19 = arith.divf %3, %18 : vector<8x32xf32>
    %cst_8 = arith.constant dense<0.000000e+00> : vector<8x256xf32>
    %20 = tpu.matmul %19, %11, %cst_8 {dimension_numbers = #tpu.dot_dimension_numbers<[1], [0], [0], [1], [0, 0, 1, 1], [], []>} : vector<8x32xf32>, vector<32x256xf32>, vector<8x256xf32> -> vector<8x256xf32>
    %c0_9 = arith.constant 0 : index
    %21 = memref.load %arg4[%c0_9] : memref<2xf32, #tpu.memory_space<smem>>
    %c1 = arith.constant 1 : index
    %22 = memref.load %arg4[%c1] : memref<2xf32, #tpu.memory_space<smem>>
    %23 = vector.broadcast %21 : f32 to vector<8x256xf32>
    %24 = arith.mulf %20, %23 : vector<8x256xf32>
    %25 = vector.broadcast %22 : f32 to vector<8x256xf32>
    %26 = arith.addf %24, %25 : vector<8x256xf32>
    %c0_10 = arith.constant 0 : index
    %c0_11 = arith.constant 0 : index
    %c0_12 = arith.constant 0 : index
    %27 = vector.load %arg5[%c0_10, %c0_11, %c0_12] : memref<1x8x256xf32, #tpu.memory_space<vmem>>, vector<1x8x256xf32>
    %28 = vector.shape_cast %27 : vector<1x8x256xf32> to vector<8x256xf32>
    %29 = vector.shape_cast %26 : vector<8x256xf32> to vector<1x8x256xf32>
    tpu.vector_store %arg5[%c0_10, %c0_11, %c0_12], %29 {strides = array<i32>} : memref<1x8x256xf32, #tpu.memory_space<vmem>>, vector<1x8x256xf32>,
    return
  }
  func.func @transform_0(%arg0: i32, %arg1: i32) -> (i32, i32, i32) {
    %c0_i32 = arith.constant 0 : i32
    %c0_i32_0 = arith.constant 0 : i32
    return %arg0, %c0_i32, %arg1 : i32, i32, i32
  }
  func.func @transform_1(%arg0: i32, %arg1: i32) -> (i32, i32, i32) {
    %c0_i32 = arith.constant 0 : i32
    %c0_i32_0 = arith.constant 0 : i32
    %c0_i32_1 = arith.constant 0 : i32
    return %arg0, %c0_i32, %c0_i32_0 : i32, i32, i32
  }
  func.func @transform_2(%arg0: i32, %arg1: i32) -> i32 {
    %c0_i32 = arith.constant 0 : i32
    %c0_i32_0 = arith.constant 0 : i32
    return %c0_i32 : i32
  }
  func.func @transform_3(%arg0: i32, %arg1: i32) -> (i32, i32, i32) {
    %c0_i32 = arith.constant 0 : i32
    %c0_i32_0 = arith.constant 0 : i32
    return %arg0, %c0_i32, %arg1 : i32, i32, i32
  }
}

</mosaic_0001>

<llo_original>
// kernel: tpu_custom_call.1
$region0: #{tpu_custom_call.1}
  #allocation0 [shape = 'u32[]', space=smem, size = 0x4, offset = 0x4, fixed_abs, tag = 'smem constant byte address 0x4 - core index']
  #allocation1 [shape = 'u32[72,128]{1,0:T(1,128)}', space=vmem, size = 0x9000, scoped, tag = 'internal scratch']
  %s0 = inlined_call_operand.hbm [shape: f32[2,32,256], index: 0, kind: input, shape index: {}]
  %s1 = inlined_call_operand.hbm [shape: f32[2,8,32], index: 1, kind: input, shape index: {}]
  %s2 = inlined_call_operand.vmem [shape: f32[2], index: 2, kind: input, shape index: {}]
  %s3 = inlined_call_operand.hbm [shape: f32[2,8,256], index: 3, kind: output, shape index: {}]
  %s4 = sld [smem:[#allocation0]]
  $region57: #{tpu_custom_call.1} parent=0
    _
  %s6 = ssub.s32 1, %s4
  %s7 = scalar_select 0, %s6, %s4
  $region1: #{tpu_custom_call.1} parent=0
    #allocation2 [shape = 'u8[65536]{0}', space=vmem, size = 0x10000, scoped, tag = 'input window, operand 0']
    #allocation3 [shape = 's32[2]{0}', space=sflag, size = 0x8, scoped, tag = 'scoped memory for tpu_custom_call.1']
    #allocation4 [shape = 's32[2]{0}', space=sflag, size = 0x8, scoped, tag = 'scoped memory for tpu_custom_call.1']
    #allocation5 [shape = 's32[2]{0}', space=sflag, size = 0x8, scoped, tag = 'scoped memory for tpu_custom_call.1']
    #allocation6 [shape = 'u8[8192]{0}', space=vmem, size = 0x2000, scoped, tag = 'input window, operand 1']
    #allocation7 [shape = 's32[2]{0}', space=sflag, size = 0x8, scoped, tag = 'scoped memory for tpu_custom_call.1']
    #allocation8 [shape = 'u8[512]{0}', space=smem, size = 0x200, scoped, tag = 'input window, operand 2, single buffered']
    #allocation9 [shape = 'u8[16384]{0}', space=vmem, size = 0x4000, scoped, tag = 'output window, operand 0']
    %8 = vsyncpa [#allocation3], 0
    %s9 = scalar_lea.sflag [#allocation3], 1
    %10 = vsyncpa %s9, 0
    %11 = vsyncpa [#allocation7], 0
    %s12 = scalar_lea.sflag [#allocation7], 1
    %13 = vsyncpa %s12, 0
    %14 = vsyncpa [#allocation5], 0
    %15 = vsyncpa [#allocation4], 0
    %s16 = scalar_lea.sflag [#allocation4], 1
    %17 = vsyncpa %s16, 0
    loop: start=0, step=1, limit=4
    $region2: #{tpu_custom_call.1} parent=1 // loop_pre_header
      _
    $region3: #{tpu_custom_call.1} parent=1 // loop_header
      %s19 = sphi 0, %s23
      %p20 = scmp.ge.s32.totalorder %s19, 4
      %s26 = sphi 0, %s38
      %s27 = sphi 0, %s34
      %s28 = sphi 0, %s26
      %s29 = sphi 0, %s27
      %s30 = sphi 0, %s28
      %s31 = sphi 0, %s29
      %s43 = sphi 0, %s45
      %s46 = sphi 0, %s43
      %s47 = sphi 0, %s46
      %s63 = sphi 0, %s47
      %s69 = sphi 0, %s71
      %s72 = sphi 0, %s69
      %s73 = sphi 0, %s72
      %s89 = sphi 0, %s73
      %s93 = sphi 0, %s93
      %s95 = sphi 0, %s93
      %s96 = sphi 0, %s95
      %s110 = sphi 0, %s96
      %s118 = sphi 0, %s120
      %s121 = sphi 0, %s118
      %s122 = sphi 0, %s121
      %s138 = sphi 0, %s122
    $region4: #{tpu_custom_call.1} parent=1 // loop_header_branch
      %22 = sbr.rel (%p20) target = $region8
    $region5: #{tpu_custom_call.1} parent=1 // loop_body
      %s24 = ssub.s32 %s19, 1
      %s25 = ssub.s32 %s19, 2
      %s32 = sadd.s32 1, %s27
      %p33 = scmp.ge.s32.totalorder %s32, 1
      %s34 = scalar_select %p33, 0, %s32
      %s35 = sadd.s32 1, %s26
      %s36 = scalar_select %p33, %s35, %s26
      %p37 = scmp.ge.s32.totalorder %s36, 2
      %s38 = scalar_select %p37, 0, %s36
      %s39 = ssub.s32 %s26, %s38
      %s40 = ssub.s32 %s27, %s34
      %s41 = sor.u32 %s39, %s40
      %p42 = scmp.eq.s32.totalorder %s41, 0
      %s44 = sadd.s32 %s43, 1
      %s45 = scalar_select %p42, %s43, %s44
      %p48 = pneg %p42
      %p49 = scmp.eq.s32.totalorder %s19, 1
      %p50 = por %p48, %p49
      %p51 = scmp.ne.s32.totalorder %s43, %s46
      %p52 = scmp.eq.s32.totalorder %s19, 0
      %p53 = por %p51, %p52
      %p54 = scmp.ne.s32.totalorder %s43, %s46
      %p55 = scmp.eq.s32.totalorder %s24, 1
      %p56 = por %p54, %p55
      %p57 = scmp.ne.s32.totalorder %s46, %s47
      %p58 = scmp.eq.s32.totalorder %s24, 0
      %p59 = por %p57, %p58
      %p60 = scmp.ne.s32.totalorder %s46, %s47
      %p61 = scmp.eq.s32.totalorder %s25, 1
      %p62 = por %p60, %p61
      %p64 = scmp.ne.s32.totalorder %s47, %s63
      %p65 = scmp.eq.s32.totalorder %s25, 0
      %p66 = por %p64, %p65
      %s67 = ssub.s32 %s26, %s38
      %p68 = scmp.eq.s32.totalorder %s67, 0
      %s70 = sadd.s32 %s69, 1
      %s71 = scalar_select %p68, %s69, %s70
      %p74 = pneg %p68
      %p75 = scmp.eq.s32.totalorder %s19, 1
      %p76 = por %p74, %p75
      %p77 = scmp.ne.s32.totalorder %s69, %s72
      %p78 = scmp.eq.s32.totalorder %s19, 0
      %p79 = por %p77, %p78
      %p80 = scmp.ne.s32.totalorder %s69, %s72
      %p81 = scmp.eq.s32.totalorder %s24, 1
      %p82 = por %p80, %p81
      %p83 = scmp.ne.s32.totalorder %s72, %s73
      %p84 = scmp.eq.s32.totalorder %s24, 0
      %p85 = por %p83, %p84
      %p86 = scmp.ne.s32.totalorder %s72, %s73
      %p87 = scmp.eq.s32.totalorder %s25, 1
      %p88 = por %p86, %p87
      %p90 = scmp.ne.s32.totalorder %s73, %s89
      %p91 = scmp.eq.s32.totalorder %s25, 0
      %p92 = por %p90, %p91
      %s94 = sadd.s32 %s93, 1
      %p97 = scmp.eq.s32.totalorder %s19, 1
      %p98 = scmp.ne.s32.totalorder %s93, %s95
      %p99 = scmp.eq.s32.totalorder %s19, 0
      %p100 = por %p98, %p99
      %p101 = scmp.ne.s32.totalorder %s93, %s95
      %p102 = scmp.eq.s32.totalorder %s24, 1
      %p103 = por %p101, %p102
      %p104 = scmp.ne.s32.totalorder %s95, %s96
      %p105 = scmp.eq.s32.totalorder %s24, 0
      %p106 = por %p104, %p105
      %p107 = scmp.ne.s32.totalorder %s95, %s96
      %p108 = scmp.eq.s32.totalorder %s25, 1
      %p109 = por %p107, %p108
      %p111 = scmp.ne.s32.totalorder %s96, %s110
      %p112 = scmp.eq.s32.totalorder %s25, 0
      %p113 = por %p111, %p112
      %s114 = ssub.s32 %s26, %s38
      %s115 = ssub.s32 %s27, %s34
      %s116 = sor.u32 %s114, %s115
      %p117 = scmp.eq.s32.totalorder %s116, 0
      %s119 = sadd.s32 %s118, 1
      %s120 = scalar_select %p117, %s118, %s119
      %p123 = pneg %p117
      %p124 = scmp.eq.s32.totalorder %s19, 1
      %p125 = por %p123, %p124
      %p126 = scmp.ne.s32.totalorder %s118, %s121
      %p127 = scmp.eq.s32.totalorder %s19, 0
      %p128 = por %p126, %p127
      %p129 = scmp.ne.s32.totalorder %s118, %s121
      %p130 = scmp.eq.s32.totalorder %s24, 1
      %p131 = por %p129, %p130
      %p132 = scmp.ne.s32.totalorder %s121, %s122
      %p133 = scmp.eq.s32.totalorder %s24, 0
      %p134 = por %p132, %p133
      %p135 = scmp.ne.s32.totalorder %s121, %s122
      %p136 = scmp.eq.s32.totalorder %s25, 1
      %p137 = por %p135, %p136
      %p139 = scmp.ne.s32.totalorder %s122, %s138
      %p140 = scmp.eq.s32.totalorder %s25, 0
      %p141 = por %p139, %p140
      %p142 = scmp.le.s32.totalorder 1, %s19
      %p143 = scmp.lt.s32.totalorder %s19, 3
      %p144 = pnand %p142, %p143
      %p145 = pneg %p144
      // Predicated region
      $region9: #{tpu_custom_call.1} parent=5 // pred_check
        _
      $region10: #{tpu_custom_call.1} parent=5 // pred_check_branch
        %147 = sbr.rel (%p144) target = $region12
      $region11: #{tpu_custom_call.1} parent=5 // pred_region
        %s148 = ssub.s32 %s19, 1
        // Predicated region
        $region13: #{tpu_custom_call.1} parent=11 // pred_check
          %p149 = pneg %p106
        $region14: #{tpu_custom_call.1} parent=11 // pred_check_branch
          %151 = sbr.rel (%p149) target = $region16
        $region15: #{tpu_custom_call.1} parent=11 // pred_region
          %153 = vsyncadd [#allocation5], 0
          %s155 = sshll.u32 %s2, 4
          %s156 = int_to_ptr.vmem [resolvable:$true] %s155
          %158 = dma.vmem_to_smem %s156, 16, [#allocation8], [#allocation5]
        $region16: #{tpu_custom_call.1} parent=11 // pred_fallthru
          _
      $region12: #{tpu_custom_call.1} parent=5 // pred_fallthru
        _
      %p159 = scmp.lt.s32.totalorder %s19, 2
      // Predicated region
      $region17: #{tpu_custom_call.1} parent=5 // pred_check
        %p160 = pneg %p159
      $region18: #{tpu_custom_call.1} parent=5 // pred_check_branch
        %162 = sbr.rel (%p160) target = $region20
      $region19: #{tpu_custom_call.1} parent=5 // pred_region
        // Predicated region
        $region21: #{tpu_custom_call.1} parent=19 // pred_check
          %p163 = pneg %p53
        $region22: #{tpu_custom_call.1} parent=19 // pred_check_branch
          %165 = sbr.rel (%p163) target = $region24
        $region23: #{tpu_custom_call.1} parent=19 // pred_region
          %s166 = sand.u32 %s43, 1
          %s167 = scalar_lea.sflag [#allocation3], %s166
          %s168 = sand.u32 %s43, 1
          %s169 = smul.addr %s168, 64
          %s170 = scalar_lea.vmem [#allocation2], %s169
          %s171 = smul.u32 2, %s27
          %173 = vsyncadd %s167, 0
          %s174 = smul.addr %s26, 8
          %s175 = sadd.s32 %s171, %s174
          %s176 = smul.addr %s175, 8
          %s177 = scalar_lea.hbm %s0, %s176
          %s178 = sshll.u32 %s177, 4
          %s179 = int_to_ptr.hbm [resolvable:$true] %s178
          %s180 = sshll.u32 %s170, 4
          %s181 = int_to_ptr.vmem [resolvable:$true] %s180
          %186 = dma.hbm_to_vmem [thread:$0]  %s179, 1024, %s181, %s167, 256, 256, 16
        $region24: #{tpu_custom_call.1} parent=19 // pred_fallthru
          _
        // Predicated region
        $region25: #{tpu_custom_call.1} parent=19 // pred_check
          %p187 = pneg %p79
        $region26: #{tpu_custom_call.1} parent=19 // pred_check_branch
          %189 = sbr.rel (%p187) target = $region28
        $region27: #{tpu_custom_call.1} parent=19 // pred_region
          %s190 = sand.u32 %s69, 1
          %s191 = scalar_lea.sflag [#allocation7], %s190
          %s192 = sand.u32 %s69, 1
          %s193 = smul.addr %s192, 8
          %s194 = scalar_lea.vmem [#allocation6], %s193
          %196 = vsyncadd %s191, 0
          %s197 = smul.addr %s26, 8
          %s198 = scalar_lea.hbm %s1, %s197
          %s200 = sshll.u32 %s198, 4
          %s201 = int_to_ptr.hbm [resolvable:$true] %s200
          %s202 = sshll.u32 %s194, 4
          %s203 = int_to_ptr.vmem [resolvable:$true] %s202
          %205 = dma.hbm_to_vmem [thread:$0]  %s201, 128, %s203, %s191
        $region28: #{tpu_custom_call.1} parent=19 // pred_fallthru
          _
      $region20: #{tpu_custom_call.1} parent=5 // pred_fallthru
        _
      %p206 = scmp.le.s32.totalorder 1, %s19
      %p207 = scmp.lt.s32.totalorder %s19, 3
      %p208 = pnand %p206, %p207
      %p209 = pneg %p208
      // Predicated region
      $region29: #{tpu_custom_call.1} parent=5 // pred_check
        _
      $region30: #{tpu_custom_call.1} parent=5 // pred_check_branch
        %211 = sbr.rel (%p208) target = $region32
      $region31: #{tpu_custom_call.1} parent=5 // pred_region
        %s212 = ssub.s32 %s19, 1
        %s213 = sand.u32 %s46, 1
        %s214 = scalar_lea.sflag [#allocation3], %s213
        %s215 = sand.u32 %s46, 1
        %s216 = smul.addr %s215, 64
        %s217 = scalar_lea.vmem [#allocation2], %s216
        // Predicated region
        $region33: #{tpu_custom_call.1} parent=31 // pred_check
          %p218 = pneg %p59
        $region34: #{tpu_custom_call.1} parent=31 // pred_check_branch
          %220 = sbr.rel (%p218) target = $region36
        $region35: #{tpu_custom_call.1} parent=31 // pred_region
          %222 = dma.done %s214, 1024
        $region36: #{tpu_custom_call.1} parent=31 // pred_fallthru
          _
        %s223 = sand.u32 %s72, 1
        %s224 = scalar_lea.sflag [#allocation7], %s223
        %s225 = sand.u32 %s72, 1
        %s226 = smul.addr %s225, 8
        %s227 = scalar_lea.vmem [#allocation6], %s226
        // Predicated region
        $region37: #{tpu_custom_call.1} parent=31 // pred_check
          %p228 = pneg %p85
        $region38: #{tpu_custom_call.1} parent=31 // pred_check_branch
          %230 = sbr.rel (%p228) target = $region40
        $region39: #{tpu_custom_call.1} parent=31 // pred_region
          %232 = dma.done %s224, 128
        $region40: #{tpu_custom_call.1} parent=31 // pred_fallthru
          _
        // Predicated region
        $region41: #{tpu_custom_call.1} parent=31 // pred_check
          %p233 = pneg %p106
        $region42: #{tpu_custom_call.1} parent=31 // pred_check_branch
          %235 = sbr.rel (%p233) target = $region44
        $region43: #{tpu_custom_call.1} parent=31 // pred_region
          %237 = dma.done [#allocation5], 16
        $region44: #{tpu_custom_call.1} parent=31 // pred_fallthru
          _
        %238 = sfence
        %s239 = sand.u32 %s46, 1
        %s240 = scalar_lea.sflag [#allocation3], %s239
        %s241 = sand.u32 %s46, 1
        %s242 = smul.addr %s241, 64
        %s243 = scalar_lea.vmem [#allocation2], %s242
        %p244 = pneg %p59
        %p245 = pneg %p56
        %s246 = sand.u32 %s72, 1
        %s247 = scalar_lea.sflag [#allocation7], %s246
        %s248 = sand.u32 %s72, 1
        %s249 = smul.addr %s248, 8
        %s250 = scalar_lea.vmem [#allocation6], %s249
        %p251 = pneg %p85
        %p252 = pneg %p82
        %p253 = pneg %p106
        %p254 = pneg %p103
        %p255 = pneg %p134
        %p256 = pneg %p131
        %s257 = sand.u32 %s121, 1
        %s258 = scalar_lea.sflag [#allocation4], %s257
        %s259 = sand.u32 %s121, 1
        %s260 = smul.addr %s259, 16
        %s261 = scalar_lea.vmem [#allocation9], %s260
        %s262 = smul.u32 2, %s29
        %s263 = smul.u32 2, %s29
        %v264 = vld [vmem:[%s217] sm:$0xff]
        %v265 = vld [vmem:[%s217 + $0x8] sm:$0xff]
        %v266 = vld [vmem:[%s217 + $0x10] sm:$0xff]
        %v267 = vld [vmem:[%s217 + $0x18] sm:$0xff]
        %v268 = vld [vmem:[%s217 + $0x20] sm:$0xff]
        %v269 = vld [vmem:[%s217 + $0x28] sm:$0xff]
        %v270 = vld [vmem:[%s217 + $0x30] sm:$0xff]
        %v271 = vld [vmem:[%s217 + $0x38] sm:$0xff]
        %v272 = vld [vmem:[%s227] sm:$0xff]
        %v273 = vmul.f32 %v264, %v264
        %v274 = vmul.f32 %v265, %v265
        %v275 = vmul.f32 %v266, %v266
        %v276 = vmul.f32 %v267, %v267
        %v277 = vmul.f32 %v268, %v268
        %v278 = vmul.f32 %v269, %v269
        %v279 = vmul.f32 %v270, %v270
        %v280 = vmul.f32 %v271, %v271
        %v281 = vadd.f32 %v273, %v275
        %v282 = vadd.f32 %v281, %v277
        %v283 = vadd.f32 %v282, %v279
        %v284 = vrot.slane %v283, 4
        %v285 = vadd.f32 %v283, %v284
        %v286 = vrot.slane %v285, 2
        %v287 = vadd.f32 %v285, %v286
        %v288 = vrot.slane %v287, 1
        %v289 = vadd.f32 %v287, %v288
        %v290 = vadd.f32 %v274, %v276
        %v291 = vadd.f32 %v290, %v278
        %v292 = vadd.f32 %v291, %v280
        %v293 = vrot.slane %v292, 4
        %v294 = vadd.f32 %v292, %v293
        %v295 = vrot.slane %v294, 2
        %v296 = vadd.f32 %v294, %v295
        %v297 = vrot.slane %v296, 1
        %v298 = vadd.f32 %v296, %v297
        %v299 = vrsqrt.pop %v289
        %v300 = vmul.f32 %v299, %v289
        %v301 = vmul.f32 %v300, %v299
        %v302 = vmul.f32 0.5, %v301
        %v303 = vsub.f32 1.5, %v302
        %v304 = vmul.f32 %v299, %v303
        %v305 = vmul.f32 %v289, %v304
        %vm306 = vcmp.eq.f32.partialorder %v289, inf
        %v307 = vsel %vm306, %v289, %v305
        %vm308 = vcmp.eq.f32.partialorder %v289, 0.0
        %v309 = vand.u32 %v289, 2147483648
        %v310 = vsel %vm308, %v309, %v307
        %v311 = vrsqrt.pop %v298
        %v312 = vmul.f32 %v311, %v298
        %v313 = vmul.f32 %v312, %v311
        %v314 = vmul.f32 0.5, %v313
        %v315 = vsub.f32 1.5, %v314
        %v316 = vmul.f32 %v311, %v315
        %v317 = vmul.f32 %v298, %v316
        %vm318 = vcmp.eq.f32.partialorder %v298, inf
        %v319 = vsel %vm318, %v298, %v317
        %vm320 = vcmp.eq.f32.partialorder %v298, 0.0
        %v321 = vand.u32 %v298, 2147483648
        %v322 = vsel %vm320, %v321, %v319
        %v323 = vmax.f32 %v310, 1e-12
        %v324 = vmax.f32 %v322, 1e-12
        %v325 = vrcp.pop %v323
        %v326 = vmul.f32 %v323, %v325
        %v327 = vsub.f32 1.0, %v326
        %v328 = vmul.f32 %v325, %v327
        %v329 = vadd.f32 %v325, %v328
        %vm330 = vweird.f32 %v323
        %vm331 = vweird.f32 %v325
        %vm332 = vmor %vm330, %vm331
        %v333 = vsel %vm332, %v325, %v329
        %v334 = vand.u32 2147483647, %v323
        %vm335 = vcmp.eq.f32.partialorder %v334, 8.507059e+37
        %v336 = vand.u32 %v323, 2147483648
        %v337 = vor.u32 1.1754944e-38, %v336
        %v338 = vsel %vm335, %v337, %v333
        %v339 = vmul.f32 %v264, %v338
        %v340 = vrcp.pop %v324
        %v341 = vmul.f32 %v324, %v340
        %v342 = vsub.f32 1.0, %v341
        %v343 = vmul.f32 %v340, %v342
        %v344 = vadd.f32 %v340, %v343
        %vm345 = vweird.f32 %v324
        %vm346 = vweird.f32 %v340
        %vm347 = vmor %vm345, %vm346
        %v348 = vsel %vm347, %v340, %v344
        %v349 = vand.u32 2147483647, %v324
        %vm350 = vcmp.eq.f32.partialorder %v349, 8.507059e+37
        %v351 = vand.u32 %v324, 2147483648
        %v352 = vor.u32 1.1754944e-38, %v351
        %v353 = vsel %vm350, %v352, %v348
        %v354 = vmul.f32 %v265, %v353
        %v355 = vmul.f32 %v266, %v338
        %v356 = vmul.f32 %v267, %v353
        %v357 = vmul.f32 %v268, %v338
        %v358 = vmul.f32 %v269, %v353
        %v359 = vmul.f32 %v270, %v338
        %v360 = vmul.f32 %v271, %v353
        %v361 = vmul.f32 %v272, %v272
        %vm362 = vcmask 261120
        %v363 = vsel %vm362, %v361, 0.0
        %364 = vadd.xlane.f32.xlu0 %v363
        %v365 = vpop.xlane.xlu0 %364
        %v366 = vrsqrt.pop %v365
        %v367 = vmul.f32 %v366, %v365
        %v368 = vmul.f32 %v367, %v366
        %v369 = vmul.f32 0.5, %v368
        %v370 = vsub.f32 1.5, %v369
        %v371 = vmul.f32 %v366, %v370
        %v372 = vmul.f32 %v365, %v371
        %vm373 = vcmp.eq.f32.partialorder %v365, inf
        %v374 = vsel %vm373, %v365, %v372
        %vm375 = vcmp.eq.f32.partialorder %v365, 0.0
        %v376 = vand.u32 %v365, 2147483648
        %v377 = vsel %vm375, %v376, %v374
        %v378 = vmax.f32 %v377, 1e-12
        %v379 = vrcp.pop %v378
        %v380 = vmul.f32 %v378, %v379
        %v381 = vsub.f32 1.0, %v380
        %v382 = vmul.f32 %v379, %v381
        %v383 = vadd.f32 %v379, %v382
        %vm384 = vweird.f32 %v378
        %vm385 = vweird.f32 %v379
        %vm386 = vmor %vm384, %vm385
        %v387 = vsel %vm386, %v379, %v383
        %v388 = vand.u32 2147483647, %v378
        %vm389 = vcmp.eq.f32.partialorder %v388, 8.507059e+37
        %v390 = vand.u32 %v378, 2147483648
        %v391 = vor.u32 1.1754944e-38, %v390
        %v392 = vsel %vm389, %v391, %v387
        %v393 = vmul.f32 %v272, %v392
        %v395 = vsel %vm362, %v393, 0
        %397 = vmatpush.msra.mxu0 0.0
        %398 = vmatpush.msra.mxu0 0.0
        %399 = vmatpush.msra.mxu0 0.0
        %400 = vmatpush.msra.mxu0 0.0
        %401 = vmatpush.msra.mxu0 0.0
        %402 = vmatpush.msra.mxu0 0.0
        %403 = vmatpush.msra.mxu0 0.0
        %404 = vmatpush.msra.mxu0 0.0
        %405 = vmatpush.msra.mxu0 0.0
        %406 = vmatpush.msra.mxu0 0.0
        %407 = vmatpush.msra.mxu0 0.0
        %408 = vmatpush.msra.mxu0 0.0
        %409 = vmatpush.msra.mxu0 %v359
        %410 = vmatpush.msra.mxu0 %v357
        %411 = vmatpush.msra.mxu0 %v355
        %412 = vmatpush.msra.mxu0 %v339
        %413 = vmatmul.f32.gmra.mxu0 %v395
        %v414 = vpop.f32.mrf.mxu0
        %v415 = vadd.f32 0.0, %v414
        %416 = vdwg.mxu0
        %417 = vmatpush.msra.mxu0 0.0
        %418 = vmatpush.msra.mxu0 0.0
        %419 = vmatpush.msra.mxu0 0.0
        %420 = vmatpush.msra.mxu0 0.0
        %421 = vmatpush.msra.mxu0 0.0
        %422 = vmatpush.msra.mxu0 0.0
        %423 = vmatpush.msra.mxu0 0.0
        %424 = vmatpush.msra.mxu0 0.0
        %425 = vmatpush.msra.mxu0 0.0
        %426 = vmatpush.msra.mxu0 0.0
        %427 = vmatpush.msra.mxu0 0.0
        %428 = vmatpush.msra.mxu0 0.0
        %429 = vmatpush.msra.mxu0 %v360
        %430 = vmatpush.msra.mxu0 %v358
        %431 = vmatpush.msra.mxu0 %v356
        %432 = vmatpush.msra.mxu0 %v354
        %433 = vmatmul.f32.gmra.mxu0 %v395
        %v434 = vpop.f32.mrf.mxu0
        %v435 = vadd.f32 0.0, %v434
        %436 = vdwg.mxu0
        %s437 = sld [smem:[#allocation8]]
        %s438 = sld [smem:[#allocation8 + $0x1]]
        %v439 = vstv %s437
        %v440 = vmul.f32 %v415, %v439
        %v441 = vmul.f32 %v435, %v439
        %v442 = vstv %s438
        %v443 = vadd.f32 %v440, %v442
        %v444 = vadd.f32 %v441, %v442
        %445 = vst [vmem:[%s261] sm:$0xff] %v443
        %446 = vst [vmem:[%s261 + $0x8] sm:$0xff] %v444
        %s447 = sand.u32 %s121, 1
        %s448 = scalar_lea.sflag [#allocation4], %s447
        %s449 = sand.u32 %s121, 1
        %s450 = smul.addr %s449, 16
        %s451 = scalar_lea.vmem [#allocation9], %s450
        // Predicated region
        $region45: #{tpu_custom_call.1} parent=31 // pred_check
          %p452 = pneg %p131
        $region46: #{tpu_custom_call.1} parent=31 // pred_check_branch
          %454 = sbr.rel (%p452) target = $region48
        $region47: #{tpu_custom_call.1} parent=31 // pred_region
          %s455 = smul.u32 2, %s29
          %457 = vsyncadd %s448, 0
          %s458 = smul.addr %s28, 2
          %s459 = sadd.s32 %s455, %s458
          %s460 = smul.addr %s459, 8
          %s461 = scalar_lea.hbm %s3, %s460
          %s463 = sshll.u32 %s451, 4
          %s464 = int_to_ptr.vmem [resolvable:$true] %s463
          %s465 = sshll.u32 %s461, 4
          %s466 = int_to_ptr.hbm [resolvable:$true] %s465
          %468 = dma.vmem_to_hbm [thread:$0]  %s464, 256, %s466, %s448
        $region48: #{tpu_custom_call.1} parent=31 // pred_fallthru
          _
      $region32: #{tpu_custom_call.1} parent=5 // pred_fallthru
        _
      %p469 = scmp.le.s32.totalorder 2, %s19
      // Predicated region
      $region49: #{tpu_custom_call.1} parent=5 // pred_check
        %p470 = pneg %p469
      $region50: #{tpu_custom_call.1} parent=5 // pred_check_branch
        %472 = sbr.rel (%p470) target = $region52
      $region51: #{tpu_custom_call.1} parent=5 // pred_region
        %s473 = ssub.s32 %s19, 2
        // Predicated region
        $region53: #{tpu_custom_call.1} parent=51 // pred_check
          %p474 = pneg %p137
        $region54: #{tpu_custom_call.1} parent=51 // pred_check_branch
          %476 = sbr.rel (%p474) target = $region56
        $region55: #{tpu_custom_call.1} parent=51 // pred_region
          %s477 = sand.u32 %s122, 1
          %s478 = scalar_lea.sflag [#allocation4], %s477
          %s479 = sand.u32 %s122, 1
          %s480 = smul.addr %s479, 16
          %s481 = scalar_lea.vmem [#allocation9], %s480
          %483 = dma.done %s478, 256
        $region56: #{tpu_custom_call.1} parent=51 // pred_fallthru
          _
      $region52: #{tpu_custom_call.1} parent=5 // pred_fallthru
        _
    $region6: #{tpu_custom_call.1} parent=1 // loop_footer
      %s23 = sadd.s32 1, %s19
    $region7: #{tpu_custom_call.1} parent=1 // loop_footer_branch
      %18 = sbr.rel target = $region3
    $region8: #{tpu_custom_call.1} parent=1 // loop_exit
      _
    %484 = vsyncpa [#allocation3], 1
    %s485 = scalar_lea.sflag [#allocation3], 1
    %486 = vsyncpa %s485, 1
    %487 = vsyncpa [#allocation7], 1
    %s488 = scalar_lea.sflag [#allocation7], 1
    %489 = vsyncpa %s488, 1
    %490 = vsyncpa [#allocation4], 1
    %s491 = scalar_lea.sflag [#allocation4], 1
    %492 = vsyncpa %s491, 1
    %493 = vsyncpa [#allocation5], 1
    %s494 = scalar_lea.sflag [#allocation5], 1
    %495 = vsyncpa %s494, 1

</llo_original>
